<compile_context>
chip_gen: v5e
topology: v5e:2x2
jax: 0.10.0
libtpu: 0.0.40
codegen_flags: <defaults>
</compile_context>

<pallas_src>
from functools import partial

import jax
import jax.numpy as jnp
from jax import lax
from jax.experimental import pallas as pl
from jax.experimental.pallas import tpu as pltpu

EPS = 1e-5                                # nn.BatchNorm2d default
VMEM_LIMIT_BYTES = 48 * 1024 * 1024       # > 16/32 MiB defaults, < v7x 64 MiB physical
TILE_VMEM_BUDGET = 24 * 1024 * 1024       # live-activation budget per grid step


def _compiler_params(semantics):
    return pltpu.CompilerParams(dimension_semantics=semantics,
                                vmem_limit_bytes=VMEM_LIMIT_BYTES)


def _bn_scale_shift(sum_ref, sumsq_ref, gamma_ref, beta_ref, inv_count):
    """Fold batch-norm (training-mode batch stats) into per-channel scale/shift.

    Single-pass statistics: var = E[x^2] - mean^2, all in f32; rsqrt on the EUP.
    """
    mean = sum_ref[...] * inv_count
    var = sumsq_ref[...] * inv_count - mean * mean
    scale = gamma_ref[...] * lax.rsqrt(var + EPS)
    shift = beta_ref[...] - mean * scale
    return scale, shift


# --------------------------------------------------------------------------- #
# Pass A: conv1 (1x1) + bn1 statistics accumulation
# --------------------------------------------------------------------------- #
def conv1_stats_kernel(x_ref, w1_ref, h1_ref, sum_ref, sumsq_ref):
    @pl.when(pl.program_id(0) == 0)
    def _():
        sum_ref[...] = jnp.zeros_like(sum_ref)
        sumsq_ref[...] = jnp.zeros_like(sumsq_ref)

    xc = x_ref[...].astype(w1_ref.dtype)                          # MXU operand dtype
    h = jnp.dot(w1_ref[...], xc, preferred_element_type=jnp.float32)   # (Cm, Rt)
    sum_ref[...] += jnp.sum(h, axis=1, keepdims=True)
    sumsq_ref[...] += jnp.sum(h * h, axis=1, keepdims=True)
    h1_ref[...] = h.astype(h1_ref.dtype)


# --------------------------------------------------------------------------- #
# Pass B: bn1 + relu, 3x3 conv2 as ONE fused matmul, bn2 statistics
# --------------------------------------------------------------------------- #
def conv2_stats_kernel(W, inv_count,
                       h1_ref, w2_ref, mask_ref,
                       sum1_ref, sumsq1_ref, g1_ref, b1_ref,
                       h2_ref, sum2_ref, sumsq2_ref):
    @pl.when(pl.program_id(0) == 0)
    def _():
        sum2_ref[...] = jnp.zeros_like(sum2_ref)
        sumsq2_ref[...] = jnp.zeros_like(sumsq2_ref)

    _, Rt = h1_ref.shape
    scale1, shift1 = _bn_scale_shift(sum1_ref, sumsq1_ref, g1_ref, b1_ref, inv_count)
    h1 = jnp.maximum(h1_ref[...].astype(jnp.float32) * scale1 + shift1, 0.0)

    mask = mask_ref[...]                                          # (9, Rt) f32 {0,1}
    taps = []
    for ky in range(3):
        for kx in range(3):
            k = ky * 3 + kx
            d = (ky - 1) * W + (kx - 1)
            if d == 0:
                taps.append(h1)                                   # center tap, no mask
            else:
                shifted = pltpu.roll(h1, shift=(-d) % Rt, axis=1)  # shifted[:,r]=h1[:,r+d]
                taps.append(shifted * mask[k:k + 1, :])            # zero cross-boundary reads

    # Fused 9-tap contraction: one (Cm, 9*Cm) @ (9*Cm, Rt) MXU matmul.
    slab = jnp.concatenate(taps, axis=0).astype(w2_ref.dtype)      # (9*Cm, Rt)
    h2 = jnp.dot(w2_ref[...], slab, preferred_element_type=jnp.float32)

    sum2_ref[...] += jnp.sum(h2, axis=1, keepdims=True)
    sumsq2_ref[...] += jnp.sum(h2 * h2, axis=1, keepdims=True)
    h2_ref[...] = h2.astype(h2_ref.dtype)


# --------------------------------------------------------------------------- #
# Pass C: bn2 + relu, conv3 (1x1) + bn3 statistics
# --------------------------------------------------------------------------- #
def conv3_stats_kernel(inv_count,
                       h2_ref, w3_ref, sum2_ref, sumsq2_ref, g2_ref, b2_ref,
                       h3_ref, sum3_ref, sumsq3_ref):
    @pl.when(pl.program_id(0) == 0)
    def _():
        sum3_ref[...] = jnp.zeros_like(sum3_ref)
        sumsq3_ref[...] = jnp.zeros_like(sumsq3_ref)

    scale2, shift2 = _bn_scale_shift(sum2_ref, sumsq2_ref, g2_ref, b2_ref, inv_count)
    h2 = jnp.maximum(h2_ref[...].astype(jnp.float32) * scale2 + shift2, 0.0)
    h3 = jnp.dot(w3_ref[...], h2.astype(w3_ref.dtype),
                 preferred_element_type=jnp.float32)               # (Cout, Rt)
    sum3_ref[...] += jnp.sum(h3, axis=1, keepdims=True)
    sumsq3_ref[...] += jnp.sum(h3 * h3, axis=1, keepdims=True)
    h3_ref[...] = h3


# --------------------------------------------------------------------------- #
# Pass D: bn3 + residual add (no final relu: its result is discarded in PyTorch)
# --------------------------------------------------------------------------- #
def bn3_residual_kernel(inv_count,
                        h3_ref, x_ref, sum3_ref, sumsq3_ref, g3_ref, b3_ref,
                        o_ref):
    scale3, shift3 = _bn_scale_shift(sum3_ref, sumsq3_ref, g3_ref, b3_ref, inv_count)
    o_ref[...] = (h3_ref[...] * scale3 + shift3 + x_ref[...]).astype(o_ref.dtype)


# --------------------------------------------------------------------------- #
# Wrapper
# --------------------------------------------------------------------------- #
def _choose_images_per_tile(N, H, W, cin, cm, cout, compute_bytes,
                            budget_bytes=TILE_VMEM_BUDGET):
    """Largest whole-image, lane-aligned R tile whose live VMEM fits the budget
    (sized for v7x's 64 MiB physical VMEM with double-buffering headroom)."""
    hw = H * W

    def est(rt):
        io = 2 * (cin * 4 + 2 * cm * compute_bytes + cout * 4) * rt   # double-buffered tiles
        slab = 9 * cm * rt * (4 + compute_bytes)                      # conv2 patch slab temps
        return io + slab

    cands = [d for d in range(1, N + 1)
             if N % d == 0 and (d * hw) % 128 == 0 and est(d * hw) <= budget_bytes]
    if cands:
        return max(cands)
    # TODO(synk): sub-image (halo) tiling for very large images / channel counts.
    return N  # single full-R tile (block == full array dim is always legal)


def block_forward_cr(x_cr, params, N, H, W, *,
                     compute_dtype=jnp.bfloat16, images_per_tile=None):
    """Bottleneck block forward on channels-major activations x_cr: (Cin, N*H*W)."""
    w1, g1, b1, w2, g2, b2, w3, g3, b3 = params
    Cin = x_cr.shape[0]
    Cm = w1.shape[0]
    Cout = w3.shape[0]
    assert Cin == Cout, "residual add needs in_channels == 4*inter_channels"
    R = N * H * W
    hw = H * W
    cbytes = jnp.dtype(compute_dtype).itemsize

    if images_per_tile is None:
        images_per_tile = _choose_images_per_tile(N, H, W, Cin, Cm, Cout, cbytes)
    assert N % images_per_tile == 0, "tiles must be whole multiples of H*W (whole images)"
    Rt = images_per_tile * hw
    n_tiles = R // Rt
    inv_count = 1.0 / R

    # One-time parameter prep: compute-dtype weights, fused (Cm, 9*Cm) conv2 weight.
    w1c = w1.astype(compute_dtype)
    w2c = jnp.transpose(w2, (1, 0, 2)).reshape(Cm, 9 * Cm).astype(compute_dtype)
    w3c = w3.astype(compute_dtype)

    # Precompute the 9 tap boundary masks for one tile (periodic in H*W), so the
    # kernel does no integer div/mod and the mask stays VMEM-resident.
    r = jnp.arange(Rt, dtype=jnp.int32)
    xs = r % W
    ys = (r // W) % H
    rows = []
    for ky in range(3):
        for kx in range(3):
            dy, dx = ky - 1, kx - 1
            rows.append((xs + dx >= 0) & (xs + dx < W) & (ys + dy >= 0) & (ys + dy < H))
    mask = jnp.stack(rows, axis=0).astype(jnp.float32)            # (9, Rt)

    def tile_spec(c):      # R-tiled activation blocks (lane-dense, multiple of 128)
        return pl.BlockSpec((c, Rt), lambda i: (0, i))

    def vec_spec(c):       # per-channel vectors / stats accumulators (VMEM-resident)
        return pl.BlockSpec((c, 1), lambda i: (0, 0))

    def full_spec(shape):  # weights / masks, DMA'd once and kept resident
        return pl.BlockSpec(shape, lambda i: (0, 0))

    # ---- Pass A: conv1 + bn1 stats -----------------------------------------
    h1raw, s1, q1 = pl.pallas_call(
        conv1_stats_kernel,
        grid=(n_tiles,),
        in_specs=[tile_spec(Cin), full_spec((Cm, Cin))],
        out_specs=(tile_spec(Cm), vec_spec(Cm), vec_spec(Cm)),
        out_shape=(jax.ShapeDtypeStruct((Cm, R), compute_dtype),
                   jax.ShapeDtypeStruct((Cm, 1), jnp.float32),
                   jax.ShapeDtypeStruct((Cm, 1), jnp.float32)),
        compiler_params=_compiler_params(("arbitrary",)),
    )(x_cr, w1c)

    # ---- Pass B: bn1+relu, fused 3x3 conv2 + bn2 stats ----------------------
    h2raw, s2, q2 = pl.pallas_call(
        partial(conv2_stats_kernel, W, inv_count),
        grid=(n_tiles,),
        in_specs=[tile_spec(Cm), full_spec((Cm, 9 * Cm)), full_spec((9, Rt)),
                  vec_spec(Cm), vec_spec(Cm), vec_spec(Cm), vec_spec(Cm)],
        out_specs=(tile_spec(Cm), vec_spec(Cm), vec_spec(Cm)),
        out_shape=(jax.ShapeDtypeStruct((Cm, R), compute_dtype),
                   jax.ShapeDtypeStruct((Cm, 1), jnp.float32),
                   jax.ShapeDtypeStruct((Cm, 1), jnp.float32)),
        compiler_params=_compiler_params(("arbitrary",)),
    )(h1raw, w2c, mask, s1, q1, g1, b1)

    # ---- Pass C: bn2+relu, conv3 + bn3 stats --------------------------------
    h3raw, s3, q3 = pl.pallas_call(
        partial(conv3_stats_kernel, inv_count),
        grid=(n_tiles,),
        in_specs=[tile_spec(Cm), full_spec((Cout, Cm)),
                  vec_spec(Cm), vec_spec(Cm), vec_spec(Cm), vec_spec(Cm)],
        out_specs=(tile_spec(Cout), vec_spec(Cout), vec_spec(Cout)),
        out_shape=(jax.ShapeDtypeStruct((Cout, R), jnp.float32),
                   jax.ShapeDtypeStruct((Cout, 1), jnp.float32),
                   jax.ShapeDtypeStruct((Cout, 1), jnp.float32)),
        compiler_params=_compiler_params(("arbitrary",)),
    )(h2raw, w3c, s2, q2, g2, b2)

    # ---- Pass D: bn3 + residual add (no cross-tile reduction -> "parallel") --
    out = pl.pallas_call(
        partial(bn3_residual_kernel, inv_count),
        grid=(n_tiles,),
        in_specs=[tile_spec(Cout), tile_spec(Cin),
                  vec_spec(Cout), vec_spec(Cout), vec_spec(Cout), vec_spec(Cout)],
        out_specs=tile_spec(Cout),
        out_shape=jax.ShapeDtypeStruct((Cout, R), jnp.float32),
        compiler_params=_compiler_params(("parallel",)),
    )(h3raw, x_cr, s3, q3, g3, b3)

    return out


def block_forward(x_nchw, params, stride=1, identity_downsample=None, *,
                  compute_dtype=jnp.bfloat16, images_per_tile=None):
    if stride != 1 or identity_downsample is not None:
        # TODO(synk): strided conv2 + downsample branch not implemented.
        raise NotImplementedError("only stride=1, identity_downsample=None")
    N, Cin, H, W = x_nchw.shape
    Cout = params[6].shape[0]
    # NCHW -> (C, R); when chaining blocks keep activations in (C, R) and call
    # block_forward_cr directly instead of paying this HBM transpose per block.
    x_cr = jnp.transpose(x_nchw, (1, 0, 2, 3)).reshape(Cin, N * H * W)
    out_cr = block_forward_cr(x_cr, params, N, H, W,
                              compute_dtype=compute_dtype,
                              images_per_tile=images_per_tile)
    return jnp.transpose(out_cr.reshape(Cout, N, H, W), (1, 0, 2, 3))


# --------------------------------------------------------------------------- #
# Parameters & pure-JAX reference
# --------------------------------------------------------------------------- #
def init_params(key, in_channels, inter_channels, expansion=4):
    out_channels = inter_channels * expansion
    ks = jax.random.split(key, 9)
    w1 = jax.random.normal(ks[0], (inter_channels, in_channels), jnp.float32) * (in_channels ** -0.5)
    w2 = jax.random.normal(ks[1], (9, inter_channels, inter_channels), jnp.float32) * ((9 * inter_channels) ** -0.5)
    w3 = jax.random.normal(ks[2], (out_channels, inter_channels), jnp.float32) * (inter_channels ** -0.5)
    g1 = 1.0 + 0.1 * jax.random.normal(ks[3], (inter_channels, 1), jnp.float32)
    b1 = 0.1 * jax.random.normal(ks[4], (inter_channels, 1), jnp.float32)
    g2 = 1.0 + 0.1 * jax.random.normal(ks[5], (inter_channels, 1), jnp.float32)
    b2 = 0.1 * jax.random.normal(ks[6], (inter_channels, 1), jnp.float32)
    g3 = 1.0 + 0.1 * jax.random.normal(ks[7], (out_channels, 1), jnp.float32)
    b3 = 0.1 * jax.random.normal(ks[8], (out_channels, 1), jnp.float32)
    return (w1, g1, b1, w2, g2, b2, w3, g3, b3)


def reference_forward(x, params):
    """Pure-JAX (XLA conv, f32 HIGHEST precision) reference, NCHW."""
    w1, g1, b1, w2, g2, b2, w3, g3, b3 = params
    dn = ("NCHW", "OIHW", "NCHW")
    prec = jax.lax.Precision.HIGHEST

    def bn(h, g, b):
        mean = jnp.mean(h, axis=(0, 2, 3), keepdims=True)
        var = jnp.mean((h - mean) ** 2, axis=(0, 2, 3), keepdims=True)
        return ((h - mean) * lax.rsqrt(var + EPS) * g.reshape(1, -1, 1, 1)
                + b.reshape(1, -1, 1, 1))

    identity = x
    h = lax.conv_general_dilated(x, w1[:, :, None, None], (1, 1), [(0, 0), (0, 0)],
                                 dimension_numbers=dn, precision=prec)
    h = jnp.maximum(bn(h, g1, b1), 0.0)
    wk2 = jnp.transpose(w2.reshape(3, 3, w2.shape[1], w2.shape[2]), (2, 3, 0, 1))
    h = lax.conv_general_dilated(h, wk2, (1, 1), [(1, 1), (1, 1)],
                                 dimension_numbers=dn, precision=prec)
    h = jnp.maximum(bn(h, g2, b2), 0.0)
    h = lax.conv_general_dilated(h, w3[:, :, None, None], (1, 1), [(0, 0), (0, 0)],
                                 dimension_numbers=dn, precision=prec)
    h = bn(h, g3, b3)
    return h + identity  # final relu result discarded, matching the PyTorch source


if __name__ == "__main__":
    key = jax.random.PRNGKey(0)
    k_x, k_p = jax.random.split(key)

    inter_channels = 8
    in_channels = inter_channels * 4   # residual add requires Cin == 4*inter
    N, H, W = 2, 16, 16                # R = 512, H*W = 256 (lane-aligned image tiles)

    x = jax.random.normal(k_x, (N, in_channels, H, W), jnp.float32)
    params = init_params(k_p, in_channels, inter_channels)
    ref = reference_forward(x, params)

    # f32 MXU path with forced 1-image tiles (grid of 2): tight structural check
    # of tiling, masks, rolls and the split-pass BatchNorm accumulation.
    out_f32 = jax.block_until_ready(
        block_forward(x, params, compute_dtype=jnp.float32, images_per_tile=1))
    err_f32 = float(jnp.max(jnp.abs(out_f32 - ref)))
    if not bool(jnp.allclose(out_f32, ref, atol=2e-2, rtol=2e-2)):
        raise RuntimeError(f"f32 Pallas kernel mismatch vs reference, max_err={err_f32}")

    # bf16 MXU path with auto tile selection (performance configuration).
    out_bf16 = jax.block_until_ready(block_forward(x, params))
    err_bf16 = float(jnp.max(jnp.abs(out_bf16 - ref)))
    if out_bf16.shape != (N, in_channels, H, W):
        raise RuntimeError("bad output shape")
    if not bool(jnp.allclose(out_bf16, ref, atol=1e-1, rtol=1e-1)):
        raise RuntimeError(f"bf16 Pallas kernel mismatch vs reference, max_err={err_bf16}")

    print("KERNEL_OK")
</pallas_src>

<mosaic_0001>
module attributes {stable_mosaic.version = 11 : i64} {
  func.func @conv1_stats_kernel(%arg0: i32, %arg1: memref<32x256xf32, #tpu.memory_space<vmem>>, %arg2: memref<8x32xf32, #tpu.memory_space<vmem>>, %arg3: memref<8x256xf32, #tpu.memory_space<vmem>>, %arg4: memref<8x1xf32, #tpu.memory_space<vmem>>, %arg5: memref<8x1xf32, #tpu.memory_space<vmem>>) attributes {dimension_semantics = [#tpu.dimension_semantics<arbitrary>], iteration_bounds = array<i64: 2>, scalar_prefetch = 0 : i64, scratch_operands = 0 : i64, tpu.core_type = #tpu.core_type<tc>, window_params = [{transform_indices = @transform_0, window_bounds = array<i64: 32, 256>}, {pipeline_mode = #tpu.pipeline_mode<synchronous>, transform_indices = @transform_1, window_bounds = array<i64: 8, 32>}, {transform_indices = @transform_2, window_bounds = array<i64: 8, 256>}, {pipeline_mode = #tpu.pipeline_mode<synchronous>, transform_indices = @transform_3, window_bounds = array<i64: 8, 1>}, {pipeline_mode = #tpu.pipeline_mode<synchronous>, transform_indices = @transform_4, window_bounds = array<i64: 8, 1>}]} {
    %c0_i32 = arith.constant 0 : i32
    %0 = arith.cmpi eq, %arg0, %c0_i32 : i32
    %1 = arith.extui %0 : i1 to i32
    %c0_i32_0 = arith.constant 0 : i32
    %2 = arith.cmpi ne, %1, %c0_i32_0 : i32
    scf.if %2 {
      %cst_16 = arith.constant 0.000000e+00 : f32
      %18 = vector.broadcast %cst_16 : f32 to vector<8x1xf32>
      %c0_17 = arith.constant 0 : index
      %c0_18 = arith.constant 0 : index
      %19 = vector.load %arg4[%c0_17, %c0_18] : memref<8x1xf32, #tpu.memory_space<vmem>>, vector<8x1xf32>
      tpu.vector_store %arg4[%c0_17, %c0_18], %18 {strides = array<i32>} : memref<8x1xf32, #tpu.memory_space<vmem>>, vector<8x1xf32>,
      %cst_19 = arith.constant 0.000000e+00 : f32
      %20 = vector.broadcast %cst_19 : f32 to vector<8x1xf32>
      %c0_20 = arith.constant 0 : index
      %c0_21 = arith.constant 0 : index
      %21 = vector.load %arg5[%c0_20, %c0_21] : memref<8x1xf32, #tpu.memory_space<vmem>>, vector<8x1xf32>
      tpu.vector_store %arg5[%c0_20, %c0_21], %20 {strides = array<i32>} : memref<8x1xf32, #tpu.memory_space<vmem>>, vector<8x1xf32>,
    } else {
    }
    %c0 = arith.constant 0 : index
    %c0_1 = arith.constant 0 : index
    %3 = vector.load %arg1[%c0, %c0_1] : memref<32x256xf32, #tpu.memory_space<vmem>>, vector<32x256xf32>
    %c0_2 = arith.constant 0 : index
    %c0_3 = arith.constant 0 : index
    %4 = vector.load %arg2[%c0_2, %c0_3] : memref<8x32xf32, #tpu.memory_space<vmem>>, vector<8x32xf32>
    %cst = arith.constant dense<0.000000e+00> : vector<8x256xf32>
    %5 = tpu.matmul %4, %3, %cst {dimension_numbers = #tpu.dot_dimension_numbers<[1], [0], [0], [1], [0, 0, 1, 1], [], []>} : vector<8x32xf32>, vector<32x256xf32>, vector<8x256xf32> -> vector<8x256xf32>
    %c0_4 = arith.constant 0 : index
    %c0_5 = arith.constant 0 : index
    %6 = vector.load %arg4[%c0_4, %c0_5] : memref<8x1xf32, #tpu.memory_space<vmem>>, vector<8x1xf32>
    %cst_6 = arith.constant dense<0.000000e+00> : vector<8xf32>
    %7 = vector.multi_reduction <add>, %5, %cst_6 [1] : vector<8x256xf32> to vector<8xf32>
    %8 = vector.shape_cast %7 : vector<8xf32> to vector<8x1xf32>
    %9 = arith.addf %6, %8 : vector<8x1xf32>
    %c0_7 = arith.constant 0 : index
    %c0_8 = arith.constant 0 : index
    %10 = vector.load %arg4[%c0_7, %c0_8] : memref<8x1xf32, #tpu.memory_space<vmem>>, vector<8x1xf32>
    tpu.vector_store %arg4[%c0_7, %c0_8], %9 {strides = array<i32>} : memref<8x1xf32, #tpu.memory_space<vmem>>, vector<8x1xf32>,
    %c0_9 = arith.constant 0 : index
    %c0_10 = arith.constant 0 : index
    %11 = vector.load %arg5[%c0_9, %c0_10] : memref<8x1xf32, #tpu.memory_space<vmem>>, vector<8x1xf32>
    %12 = arith.mulf %5, %5 : vector<8x256xf32>
    %cst_11 = arith.constant dense<0.000000e+00> : vector<8xf32>
    %13 = vector.multi_reduction <add>, %12, %cst_11 [1] : vector<8x256xf32> to vector<8xf32>
    %14 = vector.shape_cast %13 : vector<8xf32> to vector<8x1xf32>
    %15 = arith.addf %11, %14 : vector<8x1xf32>
    %c0_12 = arith.constant 0 : index
    %c0_13 = arith.constant 0 : index
    %16 = vector.load %arg5[%c0_12, %c0_13] : memref<8x1xf32, #tpu.memory_space<vmem>>, vector<8x1xf32>
    tpu.vector_store %arg5[%c0_12, %c0_13], %15 {strides = array<i32>} : memref<8x1xf32, #tpu.memory_space<vmem>>, vector<8x1xf32>,
    %c0_14 = arith.constant 0 : index
    %c0_15 = arith.constant 0 : index
    %17 = vector.load %arg3[%c0_14, %c0_15] : memref<8x256xf32, #tpu.memory_space<vmem>>, vector<8x256xf32>
    tpu.vector_store %arg3[%c0_14, %c0_15], %5 {strides = array<i32>} : memref<8x256xf32, #tpu.memory_space<vmem>>, vector<8x256xf32>,
    return
  }
  func.func @transform_0(%arg0: i32) -> (i32, i32) {
    %c0_i32 = arith.constant 0 : i32
    %c0_i32_0 = arith.constant 0 : i32
    return %c0_i32, %arg0 : i32, i32
  }
  func.func @transform_1(%arg0: i32) -> (i32, i32) {
    %c0_i32 = arith.constant 0 : i32
    %c0_i32_0 = arith.constant 0 : i32
    %c0_i32_1 = arith.constant 0 : i32
    return %c0_i32, %c0_i32_0 : i32, i32
  }
  func.func @transform_2(%arg0: i32) -> (i32, i32) {
    %c0_i32 = arith.constant 0 : i32
    %c0_i32_0 = arith.constant 0 : i32
    return %c0_i32, %arg0 : i32, i32
  }
  func.func @transform_3(%arg0: i32) -> (i32, i32) {
    %c0_i32 = arith.constant 0 : i32
    %c0_i32_0 = arith.constant 0 : i32
    %c0_i32_1 = arith.constant 0 : i32
    return %c0_i32, %c0_i32_0 : i32, i32
  }
  func.func @transform_4(%arg0: i32) -> (i32, i32) {
    %c0_i32 = arith.constant 0 : i32
    %c0_i32_0 = arith.constant 0 : i32
    %c0_i32_1 = arith.constant 0 : i32
    return %c0_i32, %c0_i32_0 : i32, i32
  }
}

</mosaic_0001>

<llo_original>
// kernel: tpu_custom_call.1
$region0: #{tpu_custom_call.1}
  #allocation0 [shape = 'u32[]', space=smem, size = 0x4, offset = 0x4, fixed_abs, tag = 'smem constant byte address 0x4 - core index']
  #allocation1 [shape = 'u32[72,128]{1,0:T(1,128)}', space=vmem, size = 0x9000, scoped, tag = 'internal scratch']
  %s0 = inlined_call_operand.hbm [shape: f32[32,512], index: 0, kind: input, shape index: {}]
  %s1 = inlined_call_operand.hbm [shape: f32[8,32], index: 1, kind: input, shape index: {}]
  %s2 = inlined_call_operand.hbm [shape: f32[8,512], index: 2, kind: output, shape index: {0}]
  %s3 = inlined_call_operand.vmem [shape: f32[8,1], index: 3, kind: output, shape index: {1}]
  %s4 = inlined_call_operand.vmem [shape: f32[8,1], index: 4, kind: output, shape index: {2}]
  %5 = xla_tuple %s2, %s3, %s4
  %s6 = sld [smem:[#allocation0]]
  $region69: #{tpu_custom_call.1} parent=0
    _
  %s8 = ssub.s32 1, %s6
  %s9 = scalar_select 0, %s8, %s6
  $region1: #{tpu_custom_call.1} parent=0
    #allocation2 [shape = 'u8[65536]{0}', space=vmem, size = 0x10000, scoped, tag = 'input window, operand 0']
    #allocation3 [shape = 's32[2]{0}', space=sflag, size = 0x8, scoped, tag = 'scoped memory for tpu_custom_call.1']
    #allocation4 [shape = 's32[2]{0}', space=sflag, size = 0x8, scoped, tag = 'scoped memory for tpu_custom_call.1']
    #allocation5 [shape = 'u8[4096]{0}', space=vmem, size = 0x1000, scoped, tag = 'input window, operand 1, single buffered']
    #allocation6 [shape = 's32[1]{0}', space=sflag, size = 0x4, scoped, tag = 'scoped memory for tpu_custom_call.1']
    #allocation7 [shape = 'u8[16384]{0}', space=vmem, size = 0x4000, scoped, tag = 'output window, operand 0']
    %10 = vsyncpa [#allocation3], 0
    %s11 = scalar_lea.sflag [#allocation3], 1
    %12 = vsyncpa %s11, 0
    %13 = vsyncpa [#allocation6], 0
    %14 = vsyncpa [#allocation4], 0
    %s15 = scalar_lea.sflag [#allocation4], 1
    %16 = vsyncpa %s15, 0
    loop: start=0, step=1, limit=4
    $region2: #{tpu_custom_call.1} parent=1 // loop_pre_header
      _
    $region3: #{tpu_custom_call.1} parent=1 // loop_header
      %s18 = sphi 0, %s22
      %p19 = scmp.ge.s32.totalorder %s18, 4
      %s28 = sphi 0, %s30
      %s31 = sphi 0, %s28
      %s32 = sphi 0, %s31
      %s48 = sphi 0, %s32
      %s52 = sphi 0, %s52
      %s54 = sphi 0, %s52
      %s55 = sphi 0, %s54
      %s69 = sphi 0, %s55
      %s75 = sphi 0, %s77
      %s78 = sphi 0, %s75
      %s79 = sphi 0, %s78
      %s95 = sphi 0, %s79
      %s99 = sphi 0, %s99
      %s101 = sphi 0, %s99
      %s102 = sphi 0, %s101
      %s116 = sphi 0, %s102
      %s120 = sphi 0, %s120
      %s122 = sphi 0, %s120
      %s123 = sphi 0, %s122
      %s137 = sphi 0, %s123
    $region4: #{tpu_custom_call.1} parent=1 // loop_header_branch
      %21 = sbr.rel (%p19) target = $region8
    $region5: #{tpu_custom_call.1} parent=1 // loop_body
      %s23 = ssub.s32 %s18, 1
      %s24 = ssub.s32 %s18, 2
      %s25 = sadd.s32 %s18, 1
      %s26 = ssub.s32 %s18, %s25
      %p27 = scmp.eq.s32.totalorder %s26, 0
      %s29 = sadd.s32 %s28, 1
      %s30 = scalar_select %p27, %s28, %s29
      %p33 = pneg %p27
      %p34 = scmp.eq.s32.totalorder %s18, 1
      %p35 = por %p33, %p34
      %p36 = scmp.ne.s32.totalorder %s28, %s31
      %p37 = scmp.eq.s32.totalorder %s18, 0
      %p38 = por %p36, %p37
      %p39 = scmp.ne.s32.totalorder %s28, %s31
      %p40 = scmp.eq.s32.totalorder %s23, 1
      %p41 = por %p39, %p40
      %p42 = scmp.ne.s32.totalorder %s31, %s32
      %p43 = scmp.eq.s32.totalorder %s23, 0
      %p44 = por %p42, %p43
      %p45 = scmp.ne.s32.totalorder %s31, %s32
      %p46 = scmp.eq.s32.totalorder %s24, 1
      %p47 = por %p45, %p46
      %p49 = scmp.ne.s32.totalorder %s32, %s48
      %p50 = scmp.eq.s32.totalorder %s24, 0
      %p51 = por %p49, %p50
      %s53 = sadd.s32 %s52, 1
      %p56 = scmp.eq.s32.totalorder %s18, 1
      %p57 = scmp.ne.s32.totalorder %s52, %s54
      %p58 = scmp.eq.s32.totalorder %s18, 0
      %p59 = por %p57, %p58
      %p60 = scmp.ne.s32.totalorder %s52, %s54
      %p61 = scmp.eq.s32.totalorder %s23, 1
      %p62 = por %p60, %p61
      %p63 = scmp.ne.s32.totalorder %s54, %s55
      %p64 = scmp.eq.s32.totalorder %s23, 0
      %p65 = por %p63, %p64
      %p66 = scmp.ne.s32.totalorder %s54, %s55
      %p67 = scmp.eq.s32.totalorder %s24, 1
      %p68 = por %p66, %p67
      %p70 = scmp.ne.s32.totalorder %s55, %s69
      %p71 = scmp.eq.s32.totalorder %s24, 0
      %p72 = por %p70, %p71
      %s73 = ssub.s32 %s18, %s25
      %p74 = scmp.eq.s32.totalorder %s73, 0
      %s76 = sadd.s32 %s75, 1
      %s77 = scalar_select %p74, %s75, %s76
      %p80 = pneg %p74
      %p81 = scmp.eq.s32.totalorder %s18, 1
      %p82 = por %p80, %p81
      %p83 = scmp.ne.s32.totalorder %s75, %s78
      %p84 = scmp.eq.s32.totalorder %s18, 0
      %p85 = por %p83, %p84
      %p86 = scmp.ne.s32.totalorder %s75, %s78
      %p87 = scmp.eq.s32.totalorder %s23, 1
      %p88 = por %p86, %p87
      %p89 = scmp.ne.s32.totalorder %s78, %s79
      %p90 = scmp.eq.s32.totalorder %s23, 0
      %p91 = por %p89, %p90
      %p92 = scmp.ne.s32.totalorder %s78, %s79
      %p93 = scmp.eq.s32.totalorder %s24, 1
      %p94 = por %p92, %p93
      %p96 = scmp.ne.s32.totalorder %s79, %s95
      %p97 = scmp.eq.s32.totalorder %s24, 0
      %p98 = por %p96, %p97
      %s100 = sadd.s32 %s99, 1
      %p103 = scmp.eq.s32.totalorder %s18, 1
      %p104 = scmp.ne.s32.totalorder %s99, %s101
      %p105 = scmp.eq.s32.totalorder %s18, 0
      %p106 = por %p104, %p105
      %p107 = scmp.ne.s32.totalorder %s99, %s101
      %p108 = scmp.eq.s32.totalorder %s23, 1
      %p109 = por %p107, %p108
      %p110 = scmp.ne.s32.totalorder %s101, %s102
      %p111 = scmp.eq.s32.totalorder %s23, 0
      %p112 = por %p110, %p111
      %p113 = scmp.ne.s32.totalorder %s101, %s102
      %p114 = scmp.eq.s32.totalorder %s24, 1
      %p115 = por %p113, %p114
      %p117 = scmp.ne.s32.totalorder %s102, %s116
      %p118 = scmp.eq.s32.totalorder %s24, 0
      %p119 = por %p117, %p118
      %s121 = sadd.s32 %s120, 1
      %p124 = scmp.eq.s32.totalorder %s18, 1
      %p125 = scmp.ne.s32.totalorder %s120, %s122
      %p126 = scmp.eq.s32.totalorder %s18, 0
      %p127 = por %p125, %p126
      %p128 = scmp.ne.s32.totalorder %s120, %s122
      %p129 = scmp.eq.s32.totalorder %s23, 1
      %p130 = por %p128, %p129
      %p131 = scmp.ne.s32.totalorder %s122, %s123
      %p132 = scmp.eq.s32.totalorder %s23, 0
      %p133 = por %p131, %p132
      %p134 = scmp.ne.s32.totalorder %s122, %s123
      %p135 = scmp.eq.s32.totalorder %s24, 1
      %p136 = por %p134, %p135
      %p138 = scmp.ne.s32.totalorder %s123, %s137
      %p139 = scmp.eq.s32.totalorder %s24, 0
      %p140 = por %p138, %p139
      %p141 = scmp.le.s32.totalorder 1, %s18
      %p142 = scmp.lt.s32.totalorder %s18, 3
      %p143 = pnand %p141, %p142
      %p144 = pneg %p143
      // Predicated region
      $region9: #{tpu_custom_call.1} parent=5 // pred_check
        _
      $region10: #{tpu_custom_call.1} parent=5 // pred_check_branch
        %146 = sbr.rel (%p143) target = $region12
      $region11: #{tpu_custom_call.1} parent=5 // pred_region
        %s147 = ssub.s32 %s18, 1
        // Predicated region
        $region13: #{tpu_custom_call.1} parent=11 // pred_check
          %p148 = pneg %p65
        $region14: #{tpu_custom_call.1} parent=11 // pred_check_branch
          %150 = sbr.rel (%p148) target = $region16
        $region15: #{tpu_custom_call.1} parent=11 // pred_region
          %152 = vsyncadd [#allocation6], 0
          %s154 = sshll.u32 %s1, 4
          %s155 = int_to_ptr.hbm [resolvable:$true] %s154
          %s156 = sshll.u32 [#allocation5], 4
          %s157 = int_to_ptr.vmem [resolvable:$true] %s156
          %159 = dma.hbm_to_vmem [thread:$0]  %s155, 128, %s157, [#allocation6]
        $region16: #{tpu_custom_call.1} parent=11 // pred_fallthru
          _
      $region12: #{tpu_custom_call.1} parent=5 // pred_fallthru
        _
      %p160 = scmp.lt.s32.totalorder %s18, 2
      // Predicated region
      $region17: #{tpu_custom_call.1} parent=5 // pred_check
        %p161 = pneg %p160
      $region18: #{tpu_custom_call.1} parent=5 // pred_check_branch
        %163 = sbr.rel (%p161) target = $region20
      $region19: #{tpu_custom_call.1} parent=5 // pred_region
        // Predicated region
        $region21: #{tpu_custom_call.1} parent=19 // pred_check
          %p164 = pneg %p38
        $region22: #{tpu_custom_call.1} parent=19 // pred_check_branch
          %166 = sbr.rel (%p164) target = $region24
        $region23: #{tpu_custom_call.1} parent=19 // pred_region
          %s167 = sand.u32 %s28, 1
          %s168 = scalar_lea.sflag [#allocation3], %s167
          %s169 = sand.u32 %s28, 1
          %s170 = smul.addr %s169, 64
          %s171 = scalar_lea.vmem [#allocation2], %s170
          %s172 = smul.u32 2, %s18
          %174 = vsyncadd %s168, 0
          %s175 = smul.addr %s172, 8
          %s176 = scalar_lea.hbm %s0, %s175
          %s177 = sshll.u32 %s176, 4
          %s178 = int_to_ptr.hbm [resolvable:$true] %s177
          %s179 = sshll.u32 %s171, 4
          %s180 = int_to_ptr.vmem [resolvable:$true] %s179
          %185 = dma.hbm_to_vmem [thread:$0]  %s178, 1024, %s180, %s168, 512, 256, 16
        $region24: #{tpu_custom_call.1} parent=19 // pred_fallthru
          _
      $region20: #{tpu_custom_call.1} parent=5 // pred_fallthru
        _
      %p186 = scmp.le.s32.totalorder 1, %s18
      %p187 = scmp.lt.s32.totalorder %s18, 3
      %p188 = pnand %p186, %p187
      %p189 = pneg %p188
      // Predicated region
      $region25: #{tpu_custom_call.1} parent=5 // pred_check
        _
      $region26: #{tpu_custom_call.1} parent=5 // pred_check_branch
        %191 = sbr.rel (%p188) target = $region28
      $region27: #{tpu_custom_call.1} parent=5 // pred_region
        %s192 = ssub.s32 %s18, 1
        %s193 = sand.u32 %s31, 1
        %s194 = scalar_lea.sflag [#allocation3], %s193
        %s195 = sand.u32 %s31, 1
        %s196 = smul.addr %s195, 64
        %s197 = scalar_lea.vmem [#allocation2], %s196
        // Predicated region
        $region29: #{tpu_custom_call.1} parent=27 // pred_check
          %p198 = pneg %p44
        $region30: #{tpu_custom_call.1} parent=27 // pred_check_branch
          %200 = sbr.rel (%p198) target = $region32
        $region31: #{tpu_custom_call.1} parent=27 // pred_region
          %202 = dma.done %s194, 1024
        $region32: #{tpu_custom_call.1} parent=27 // pred_fallthru
          _
        // Predicated region
        $region33: #{tpu_custom_call.1} parent=27 // pred_check
          %p203 = pneg %p65
        $region34: #{tpu_custom_call.1} parent=27 // pred_check_branch
          %205 = sbr.rel (%p203) target = $region36
        $region35: #{tpu_custom_call.1} parent=27 // pred_region
          %207 = dma.done [#allocation6], 128
        $region36: #{tpu_custom_call.1} parent=27 // pred_fallthru
          _
        %s208 = sand.u32 %s31, 1
        %s209 = scalar_lea.sflag [#allocation3], %s208
        %s210 = sand.u32 %s31, 1
        %s211 = smul.addr %s210, 64
        %s212 = scalar_lea.vmem [#allocation2], %s211
        %p213 = pneg %p44
        %p214 = pneg %p41
        %p215 = pneg %p65
        %p216 = pneg %p62
        %p217 = pneg %p91
        %p218 = pneg %p88
        %s219 = sand.u32 %s78, 1
        %s220 = scalar_lea.sflag [#allocation4], %s219
        %s221 = sand.u32 %s78, 1
        %s222 = smul.addr %s221, 16
        %s223 = scalar_lea.vmem [#allocation7], %s222
        %p224 = pneg %p112
        %p225 = pneg %p109
        %p226 = pneg %p133
        %p227 = pneg %p130
        %s228 = smul.u32 2, %s23
        %s229 = smul.u32 2, %s23
        %p230 = scmp.eq.s32.totalorder %s23, 0
        // Predicated region
        $region37: #{tpu_custom_call.1} parent=27 // pred_check
          %p231 = pneg %p230
        $region38: #{tpu_custom_call.1} parent=27 // pred_check_branch
          %233 = sbr.rel (%p231) target = $region40
        $region39: #{tpu_custom_call.1} parent=27 // pred_region
          %vm234 = vcmask 7168
          %235 = vst.msk [vmem:[%s3] sm:$0xff] %vm234, 0.0
          %236 = vst.msk [vmem:[%s4] sm:$0xff] %vm234, 0.0
        $region40: #{tpu_custom_call.1} parent=27 // pred_fallthru
          _
        %v237 = vld [vmem:[%s197] sm:$0xff]
        %v238 = vld [vmem:[%s197 + $0x8] sm:$0xff]
        %v239 = vld [vmem:[%s197 + $0x10] sm:$0xff]
        %v240 = vld [vmem:[%s197 + $0x18] sm:$0xff]
        %v241 = vld [vmem:[%s197 + $0x20] sm:$0xff]
        %v242 = vld [vmem:[%s197 + $0x28] sm:$0xff]
        %v243 = vld [vmem:[%s197 + $0x30] sm:$0xff]
        %v244 = vld [vmem:[%s197 + $0x38] sm:$0xff]
        %v245 = vld [vmem:[#allocation5] sm:$0xff]
        %vm246 = vcmask 261120
        %v248 = vsel %vm246, %v245, 0
        %250 = vmatpush.msra.mxu0 0.0
        %251 = vmatpush.msra.mxu0 0.0
        %252 = vmatpush.msra.mxu0 0.0
        %253 = vmatpush.msra.mxu0 0.0
        %254 = vmatpush.msra.mxu0 0.0
        %255 = vmatpush.msra.mxu0 0.0
        %256 = vmatpush.msra.mxu0 0.0
        %257 = vmatpush.msra.mxu0 0.0
        %258 = vmatpush.msra.mxu0 0.0
        %259 = vmatpush.msra.mxu0 0.0
        %260 = vmatpush.msra.mxu0 0.0
        %261 = vmatpush.msra.mxu0 0.0
        %262 = vmatpush.msra.mxu0 %v243
        %263 = vmatpush.msra.mxu0 %v241
        %264 = vmatpush.msra.mxu0 %v239
        %265 = vmatpush.msra.mxu0 %v237
        %266 = vmatmul.f32.gmra.mxu0 %v248
        %v267 = vpop.f32.mrf.mxu0
        %v268 = vadd.f32 0.0, %v267
        %269 = vdwg.mxu0
        %270 = vmatpush.msra.mxu0 0.0
        %271 = vmatpush.msra.mxu0 0.0
        %272 = vmatpush.msra.mxu0 0.0
        %273 = vmatpush.msra.mxu0 0.0
        %274 = vmatpush.msra.mxu0 0.0
        %275 = vmatpush.msra.mxu0 0.0
        %276 = vmatpush.msra.mxu0 0.0
        %277 = vmatpush.msra.mxu0 0.0
        %278 = vmatpush.msra.mxu0 0.0
        %279 = vmatpush.msra.mxu0 0.0
        %280 = vmatpush.msra.mxu0 0.0
        %281 = vmatpush.msra.mxu0 0.0
        %282 = vmatpush.msra.mxu0 %v244
        %283 = vmatpush.msra.mxu0 %v242
        %284 = vmatpush.msra.mxu0 %v240
        %285 = vmatpush.msra.mxu0 %v238
        %286 = vmatmul.f32.gmra.mxu0 %v248
        %v287 = vpop.f32.mrf.mxu0
        %v288 = vadd.f32 0.0, %v287
        %289 = vdwg.mxu0
        %v290 = vld [vmem:[%s3] sm:$0xff]
        %v291 = vadd.f32 %v268, %v288
        %292 = vadd.xlane.f32.xlu0 %v291
        %v293 = vpop.xlane.xlu0 %292
        %v294 = vadd.f32 %v290, %v293
        %vm295 = vcmask 7168
        %296 = vst.msk [vmem:[%s3] sm:$0xff] %vm295, %v294
        %v297 = vld [vmem:[%s4] sm:$0xff]
        %v298 = vmul.f32 %v268, %v268
        %v299 = vmul.f32 %v288, %v288
        %v300 = vadd.f32 %v298, %v299
        %301 = vadd.xlane.f32.xlu0 %v300
        %v302 = vpop.xlane.xlu0 %301
        %v303 = vadd.f32 %v297, %v302
        %304 = vst.msk [vmem:[%s4] sm:$0xff] %vm295, %v303
        %305 = vst [vmem:[%s223] sm:$0xff] %v268
        %306 = vst [vmem:[%s223 + $0x8] sm:$0xff] %v288
        %s307 = sand.u32 %s78, 1
        %s308 = scalar_lea.sflag [#allocation4], %s307
        %s309 = sand.u32 %s78, 1
        %s310 = smul.addr %s309, 16
        %s311 = scalar_lea.vmem [#allocation7], %s310
        // Predicated region
        $region41: #{tpu_custom_call.1} parent=27 // pred_check
          %p312 = pneg %p88
        $region42: #{tpu_custom_call.1} parent=27 // pred_check_branch
          %314 = sbr.rel (%p312) target = $region44
        $region43: #{tpu_custom_call.1} parent=27 // pred_region
          %s315 = smul.u32 2, %s23
          %317 = vsyncadd %s308, 0
          %s318 = smul.addr %s315, 8
          %s319 = scalar_lea.hbm %s2, %s318
          %s321 = sshll.u32 %s311, 4
          %s322 = int_to_ptr.vmem [resolvable:$true] %s321
          %s323 = sshll.u32 %s319, 4
          %s324 = int_to_ptr.hbm [resolvable:$true] %s323
          %326 = dma.vmem_to_hbm [thread:$0]  %s322, 256, %s324, %s308
        $region44: #{tpu_custom_call.1} parent=27 // pred_fallthru
          _
        // Predicated region
        $region45: #{tpu_custom_call.1} parent=27 // pred_check
          %p327 = pneg %p109
        $region46: #{tpu_custom_call.1} parent=27 // pred_check_branch
          %329 = sbr.rel (%p327) target = $region48
        $region47: #{tpu_custom_call.1} parent=27 // pred_region
          _
        $region48: #{tpu_custom_call.1} parent=27 // pred_fallthru
          _
        // Predicated region
        $region49: #{tpu_custom_call.1} parent=27 // pred_check
          %p330 = pneg %p130
        $region50: #{tpu_custom_call.1} parent=27 // pred_check_branch
          %332 = sbr.rel (%p330) target = $region52
        $region51: #{tpu_custom_call.1} parent=27 // pred_region
          _
        $region52: #{tpu_custom_call.1} parent=27 // pred_fallthru
          _
        // Predicated region
        $region53: #{tpu_custom_call.1} parent=27 // pred_check
          %p333 = pneg %p109
        $region54: #{tpu_custom_call.1} parent=27 // pred_check_branch
          %335 = sbr.rel (%p333) target = $region56
        $region55: #{tpu_custom_call.1} parent=27 // pred_region
          _
        $region56: #{tpu_custom_call.1} parent=27 // pred_fallthru
          _
        // Predicated region
        $region57: #{tpu_custom_call.1} parent=27 // pred_check
          %p336 = pneg %p130
        $region58: #{tpu_custom_call.1} parent=27 // pred_check_branch
          %338 = sbr.rel (%p336) target = $region60
        $region59: #{tpu_custom_call.1} parent=27 // pred_region
          _
        $region60: #{tpu_custom_call.1} parent=27 // pred_fallthru
          _
      $region28: #{tpu_custom_call.1} parent=5 // pred_fallthru
        _
      %p339 = scmp.le.s32.totalorder 2, %s18
      // Predicated region
      $region61: #{tpu_custom_call.1} parent=5 // pred_check
        %p340 = pneg %p339
      $region62: #{tpu_custom_call.1} parent=5 // pred_check_branch
        %342 = sbr.rel (%p340) target = $region64
      $region63: #{tpu_custom_call.1} parent=5 // pred_region
        %s343 = ssub.s32 %s18, 2
        // Predicated region
        $region65: #{tpu_custom_call.1} parent=63 // pred_check
          %p344 = pneg %p94
        $region66: #{tpu_custom_call.1} parent=63 // pred_check_branch
          %346 = sbr.rel (%p344) target = $region68
        $region67: #{tpu_custom_call.1} parent=63 // pred_region
          %s347 = sand.u32 %s79, 1
          %s348 = scalar_lea.sflag [#allocation4], %s347
          %s349 = sand.u32 %s79, 1
          %s350 = smul.addr %s349, 16
          %s351 = scalar_lea.vmem [#allocation7], %s350
          %353 = dma.done %s348, 256
        $region68: #{tpu_custom_call.1} parent=63 // pred_fallthru
          _
      $region64: #{tpu_custom_call.1} parent=5 // pred_fallthru
        _
    $region6: #{tpu_custom_call.1} parent=1 // loop_footer
      %s22 = sadd.s32 1, %s18
    $region7: #{tpu_custom_call.1} parent=1 // loop_footer_branch
      %17 = sbr.rel target = $region3
    $region8: #{tpu_custom_call.1} parent=1 // loop_exit
      _
    %354 = vsyncpa [#allocation3], 1
    %s355 = scalar_lea.sflag [#allocation3], 1
    %356 = vsyncpa %s355, 1
    %357 = vsyncpa [#allocation6], 1
    %358 = vsyncpa [#allocation4], 1
    %s359 = scalar_lea.sflag [#allocation4], 1
    %360 = vsyncpa %s359, 1

</llo_original>
